<compile_context>
chip_gen: v5e
topology: v5e:2x2
jax: 0.10.0
libtpu: 0.0.40
codegen_flags: <defaults>
</compile_context>

<pallas_src>
import jax
import jax.numpy as jnp
from jax import lax
from jax.experimental import pallas as pl
from jax.experimental.pallas import tpu as pltpu

IGNORE_INDEX = -100


def _cdiv(a, b):
    return (a + b - 1) // b


def _round_up(a, b):
    return _cdiv(a, b) * b


def _chip_generation():
    """Best-effort TPU generation detect: 4/5/6/7, or None if unknown."""
    try:
        kind = jax.devices()[0].device_kind.lower()
    except Exception:
        return None
    for tag, gen in (("v7", 7), ("v6", 6), ("v5", 5), ("v4", 4)):
        if tag in kind:
            return gen
    return None


def _make_ce_kernel(v_total: int, tv: int, n_vb: int):
    """Online-logsumexp cross-entropy over a (B, seq-block, vocab-block) grid."""
    last_tile_cols = v_total - (n_vb - 1) * tv      # static trace-time constant
    last_is_ragged = last_tile_cols < tv            # only possible when n_vb >= 2

    def kernel(logits_ref, labels_ref, loss_ref, m_sc, s_sc, t_sc):
        vj = pl.program_id(2)

        @pl.when(vj == 0)
        def _init():
            m_sc[...] = jnp.full_like(m_sc, -jnp.inf)
            s_sc[...] = jnp.zeros_like(s_sc)
            t_sc[...] = jnp.zeros_like(t_sc)

        x_raw = logits_ref[0].astype(jnp.float32)   # (TM, TV), f32 math
        labels = labels_ref[0, 0]                   # (TM, 1) int32
        tm_b, tv_b = x_raw.shape

        # Tile-local column ids (grid-invariant).  The vocab-tile offset is
        # folded into the per-row (TM,1) label instead of a per-element add.
        col_local = lax.broadcasted_iota(jnp.int32, (tm_b, tv_b), 1)
        label_local = labels - vj * tv_b            # (TM, 1)

        def update(x):
            # online max / sum-of-exp update
            m_prev = m_sc[...]
            m_new = jnp.maximum(m_prev, jnp.max(x, axis=-1, keepdims=True))
            alpha = jnp.exp(m_prev - m_new)         # first step: exp(-inf) = 0
            p = jnp.exp(x - m_new)
            s_sc[...] = s_sc[...] * alpha + jnp.sum(p, axis=-1, keepdims=True)
            m_sc[...] = m_new
            # target-logit accumulation: one-hot select (select, not multiply,
            # so garbage/NaN in ragged rows stays confined to ignore rows)
            t_sc[...] = t_sc[...] + jnp.sum(
                jnp.where(col_local == label_local, x, 0.0),
                axis=-1, keepdims=True)

        if last_is_ragged:
            is_last = vj == n_vb - 1

            @pl.when(jnp.logical_not(is_last))
            def _full_tile():                        # hot path: no tail mask
                update(x_raw)

            @pl.when(is_last)
            def _ragged_tail():                      # mask only the last tile
                update(jnp.where(col_local < last_tile_cols, x_raw, -jnp.inf))
        else:
            update(x_raw)

        @pl.when(vj == n_vb - 1)
        def _finalize():
            lse = m_sc[...] + jnp.log(s_sc[...])                 # (TM, 1)
            valid = labels != IGNORE_INDEX                       # (TM, 1)
            per_row = jnp.where(valid, lse - t_sc[...], 0.0)     # select, not mul
            block_loss = jnp.sum(per_row)                        # scalar
            # lane-dense (8,128) broadcast write
            loss_ref[...] = jnp.zeros(loss_ref.shape, jnp.float32) + block_loss

    return kernel


def gpt_lm_loss(logits, labels, *, tm=None, tv=None):
    """logits: (B, S, V) f32/bf16 (bf16 preferred: halves HBM traffic),
    labels: (B, S) int -> scalar f32 mean cross-entropy (ignore_index=-100).

    Labels must be in [0, V) or equal to -100 (PyTorch errors on others;
    here other out-of-range labels would silently contribute logsumexp)."""
    B, S, V = logits.shape
    s_shift = S - 1
    assert s_shift >= 1, "need at least 2 sequence positions"

    gen = _chip_generation()

    # --- tile selection -----------------------------------------------------
    if tm is None:
        tm = min(256, _round_up(s_shift, 8))
    tm = max(8, _round_up(int(tm), 8))
    if tm > S:
        # keep tm a multiple of 8 when possible; otherwise fall back to full dim
        tm = (S // 8) * 8 if S >= 8 else S
    if tv is None:
        # v7x: compute-bound, 64 MiB VMEM -> keep the block modest (<= 2 MiB f32).
        # v5e/v6e: memory-bound -> larger block pushes toward the HBM roofline.
        default_tv = 2048 if gen == 7 else 4096
        tv = V if V <= default_tv else default_tv
    tv = min(int(tv), V)
    if tv != V:
        assert tv % 128 == 0, "vocab tile must be a multiple of 128 or equal V"

    n_sb = _cdiv(s_shift, tm)          # seq blocks per batch row
    n_vb = _cdiv(V, tv)                # vocab blocks

    # --- labels: tiny; shift+pad in JAX (padded rows use ignore_index) -------
    labels_shift = labels[..., 1:].astype(jnp.int32)             # (B, S-1)
    pad = n_sb * tm - s_shift
    labels_padded = jnp.pad(labels_shift, ((0, 0), (0, pad)),
                            constant_values=IGNORE_INDEX)        # (B, n_sb*tm)
    labels_4d = labels_padded.reshape(B, n_sb, tm, 1)

    # valid-token count from the tiny labels tensor (kernel no longer emits it)
    total_cnt = jnp.sum((labels_shift != IGNORE_INDEX).astype(jnp.float32))

    kernel = _make_ce_kernel(V, tv, n_vb)

    cp_kwargs = dict(dimension_semantics=("parallel", "parallel", "arbitrary"))
    if gen is not None and gen <= 6:
        # memory-bound chips: make room for larger double-buffered blocks
        # (physical VMEM is 128 MiB there; default scoped limit can be 16 MiB).
        cp_kwargs["vmem_limit_bytes"] = 64 * 1024 * 1024
    # TODO(synk): if a v5e profile still shows exposed DMA, add
    # pipeline_mode=pl.Buffered(3) to the logits BlockSpec.

    loss_part = pl.pallas_call(
        kernel,
        out_shape=jax.ShapeDtypeStruct((B, n_sb, 8, 128), jnp.float32),
        grid_spec=pltpu.PrefetchScalarGridSpec(
            num_scalar_prefetch=0,
            grid=(B, n_sb, n_vb),
            in_specs=[
                # logits block: the "shift" is pure index arithmetic; rows past
                # S-1 are excluded via ignore-index labels in the padded labels.
                pl.BlockSpec((1, tm, tv), lambda b, sb, vj: (b, sb, vj)),
                pl.BlockSpec((1, 1, tm, 1), lambda b, sb, vj: (b, sb, 0, 0)),
            ],
            out_specs=pl.BlockSpec((1, 1, 8, 128),
                                   lambda b, sb, vj: (b, sb, 0, 0)),
            scratch_shapes=[
                pltpu.VMEM((tm, 1), jnp.float32),   # running max
                pltpu.VMEM((tm, 1), jnp.float32),   # running sum of exp
                pltpu.VMEM((tm, 1), jnp.float32),   # running target logit
            ],
        ),
        compiler_params=pltpu.CompilerParams(**cp_kwargs),
    )(logits, labels_4d)

    total_loss = jnp.sum(loss_part[:, :, 0, 0])
    # Plain division matches PyTorch CrossEntropyLoss(reduction='mean'):
    # if every label is ignore_index this is 0/0 -> NaN, same as torch.
    return total_loss / total_cnt


if __name__ == "__main__":
    def ref_loss(logits, labels):
        v = logits.shape[-1]
        sl = logits[..., :-1, :].reshape(-1, v).astype(jnp.float32)
        tl = labels[..., 1:].reshape(-1)
        valid = tl != IGNORE_INDEX
        tls = jnp.where(valid, tl, 0)
        lse = jax.nn.logsumexp(sl, axis=-1)
        tgt = jnp.take_along_axis(sl, tls[:, None], axis=-1)[:, 0]
        per = jnp.where(valid, lse - tgt, 0.0)
        return jnp.sum(per) / jnp.sum(valid.astype(jnp.float32))

    key = jax.random.PRNGKey(0)
    k1, k2, k3, k4, k5, k6 = jax.random.split(key, 6)

    # Case 1: toy shapes, all labels valid, single vocab tile.
    B, S, V = 2, 9, 128
    logits1 = jax.random.normal(k1, (B, S, V), dtype=jnp.float32)
    labels1 = jax.random.randint(k2, (B, S), 0, V, dtype=jnp.int32)
    loss1 = jax.jit(gpt_lm_loss)(logits1, labels1)
    jax.block_until_ready(loss1)
    assert jnp.allclose(loss1, ref_loss(logits1, labels1),
                        rtol=1e-5, atol=1e-5), ("case1", loss1)

    # Case 2: ignore_index present, ragged seq blocks, multi-tile vocab with a
    # ragged (masked-only-on-last-tile) tail -> exercises the online logsumexp,
    # the gated tail mask and the ignore path.
    B2, S2, V2 = 2, 12, 320
    logits2 = jax.random.normal(k3, (B2, S2, V2), dtype=jnp.float32)
    labels2 = jax.random.randint(k4, (B2, S2), 0, V2, dtype=jnp.int32)
    labels2 = labels2.at[0, 3].set(IGNORE_INDEX).at[1, 7].set(IGNORE_INDEX)
    loss_fn2 = jax.jit(lambda lg, lb: gpt_lm_loss(lg, lb, tm=8, tv=128))
    loss2 = loss_fn2(logits2, labels2)
    jax.block_until_ready(loss2)
    assert jnp.allclose(loss2, ref_loss(logits2, labels2),
                        rtol=1e-5, atol=1e-5), ("case2", loss2)

    # Case 3: bf16 logits (the recommended caller contract), default tiles.
    B3, S3, V3 = 2, 10, 256
    logits3 = jax.random.normal(k5, (B3, S3, V3), dtype=jnp.bfloat16)
    labels3 = jax.random.randint(k6, (B3, S3), 0, V3, dtype=jnp.int32)
    loss3 = jax.jit(gpt_lm_loss)(logits3, labels3)
    jax.block_until_ready(loss3)
    assert jnp.allclose(loss3, ref_loss(logits3, labels3),
                        rtol=1e-5, atol=1e-5), ("case3", loss3)

    print("KERNEL_OK")
</pallas_src>

<mosaic_0001>
module attributes {stable_mosaic.version = 11 : i64} {
  func.func @kernel(%arg0: i32, %arg1: i32, %arg2: i32, %arg3: memref<1x8x128xf32, #tpu.memory_space<vmem>>, %arg4: memref<1x1x8x1xi32, #tpu.memory_space<vmem>>, %arg5: memref<1x1x8x128xf32, #tpu.memory_space<vmem>>, %arg6: memref<8x1xf32, #tpu.memory_space<vmem>>, %arg7: memref<8x1xf32, #tpu.memory_space<vmem>>, %arg8: memref<8x1xf32, #tpu.memory_space<vmem>>) attributes {dimension_semantics = [#tpu.dimension_semantics<parallel>, #tpu.dimension_semantics<parallel>, #tpu.dimension_semantics<arbitrary>], iteration_bounds = array<i64: 2, 1, 1>, scalar_prefetch = 0 : i64, scratch_operands = 3 : i64, tpu.core_type = #tpu.core_type<tc>, window_params = [{transform_indices = @transform_0, window_bounds = array<i64: 1, 8, 128>}, {transform_indices = @transform_1, window_bounds = array<i64: 1, 1, 8, 1>}, {transform_indices = @transform_2, window_bounds = array<i64: 1, 1, 8, 128>}]} {
    %c0_i32 = arith.constant 0 : i32
    %0 = arith.cmpi eq, %arg2, %c0_i32 : i32
    %1 = arith.extui %0 : i1 to i32
    %c0_i32_0 = arith.constant 0 : i32
    %2 = arith.cmpi ne, %1, %c0_i32_0 : i32
    scf.if %2 {
      %cst_24 = arith.constant 0xFF800000 : f32
      %39 = vector.broadcast %cst_24 : f32 to vector<8x1xf32>
      %c0_25 = arith.constant 0 : index
      %c0_26 = arith.constant 0 : index
      %40 = vector.load %arg6[%c0_25, %c0_26] : memref<8x1xf32, #tpu.memory_space<vmem>>, vector<8x1xf32>
      tpu.vector_store %arg6[%c0_25, %c0_26], %39 {strides = array<i32>} : memref<8x1xf32, #tpu.memory_space<vmem>>, vector<8x1xf32>,
      %cst_27 = arith.constant 0.000000e+00 : f32
      %41 = vector.broadcast %cst_27 : f32 to vector<8x1xf32>
      %c0_28 = arith.constant 0 : index
      %c0_29 = arith.constant 0 : index
      %42 = vector.load %arg7[%c0_28, %c0_29] : memref<8x1xf32, #tpu.memory_space<vmem>>, vector<8x1xf32>
      tpu.vector_store %arg7[%c0_28, %c0_29], %41 {strides = array<i32>} : memref<8x1xf32, #tpu.memory_space<vmem>>, vector<8x1xf32>,
      %cst_30 = arith.constant 0.000000e+00 : f32
      %43 = vector.broadcast %cst_30 : f32 to vector<8x1xf32>
      %c0_31 = arith.constant 0 : index
      %c0_32 = arith.constant 0 : index
      %44 = vector.load %arg8[%c0_31, %c0_32] : memref<8x1xf32, #tpu.memory_space<vmem>>, vector<8x1xf32>
      tpu.vector_store %arg8[%c0_31, %c0_32], %43 {strides = array<i32>} : memref<8x1xf32, #tpu.memory_space<vmem>>, vector<8x1xf32>,
    } else {
    }
    %c0 = arith.constant 0 : index
    %c0_1 = arith.constant 0 : index
    %c0_2 = arith.constant 0 : index
    %3 = vector.load %arg3[%c0, %c0_1, %c0_2] : memref<1x8x128xf32, #tpu.memory_space<vmem>>, vector<1x8x128xf32>
    %4 = vector.shape_cast %3 : vector<1x8x128xf32> to vector<8x128xf32>
    %c0_3 = arith.constant 0 : index
    %c0_4 = arith.constant 0 : index
    %c0_5 = arith.constant 0 : index
    %c0_6 = arith.constant 0 : index
    %5 = vector.load %arg4[%c0_3, %c0_4, %c0_5, %c0_6] : memref<1x1x8x1xi32, #tpu.memory_space<vmem>>, vector<1x1x8x1xi32>
    %6 = vector.shape_cast %5 : vector<1x1x8x1xi32> to vector<8x1xi32>
    %7 = tpu.iota {dimensions = array<i32: 1>} : vector<8x128xi32>
    %c128_i32 = arith.constant 128 : i32
    %8 = arith.muli %arg2, %c128_i32 : i32
    %9 = vector.broadcast %8 : i32 to vector<8x1xi32>
    %10 = arith.subi %6, %9 : vector<8x1xi32>
    %c0_7 = arith.constant 0 : index
    %c0_8 = arith.constant 0 : index
    %11 = vector.load %arg6[%c0_7, %c0_8] : memref<8x1xf32, #tpu.memory_space<vmem>>, vector<8x1xf32>
    %cst = arith.constant dense<0xFF800000> : vector<8xf32>
    %12 = vector.multi_reduction <maximumf>, %4, %cst [1] : vector<8x128xf32> to vector<8xf32>
    %13 = vector.shape_cast %12 : vector<8xf32> to vector<8x1xf32>
    %14 = arith.maximumf %11, %13 : vector<8x1xf32>
    %15 = arith.subf %11, %14 : vector<8x1xf32>
    %16 = math.exp %15 : vector<8x1xf32>
    %17 = vector.broadcast %14 : vector<8x1xf32> to vector<8x128xf32>
    %18 = arith.subf %4, %17 : vector<8x128xf32>
    %19 = math.exp %18 : vector<8x128xf32>
    %c0_9 = arith.constant 0 : index
    %c0_10 = arith.constant 0 : index
    %20 = vector.load %arg7[%c0_9, %c0_10] : memref<8x1xf32, #tpu.memory_space<vmem>>, vector<8x1xf32>
    %21 = arith.mulf %20, %16 : vector<8x1xf32>
    %cst_11 = arith.constant dense<0.000000e+00> : vector<8xf32>
    %22 = vector.multi_reduction <add>, %19, %cst_11 [1] : vector<8x128xf32> to vector<8xf32>
    %23 = vector.shape_cast %22 : vector<8xf32> to vector<8x1xf32>
    %24 = arith.addf %21, %23 : vector<8x1xf32>
    %c0_12 = arith.constant 0 : index
    %c0_13 = arith.constant 0 : index
    %25 = vector.load %arg7[%c0_12, %c0_13] : memref<8x1xf32, #tpu.memory_space<vmem>>, vector<8x1xf32>
    tpu.vector_store %arg7[%c0_12, %c0_13], %24 {strides = array<i32>} : memref<8x1xf32, #tpu.memory_space<vmem>>, vector<8x1xf32>,
    %c0_14 = arith.constant 0 : index
    %c0_15 = arith.constant 0 : index
    %26 = vector.load %arg6[%c0_14, %c0_15] : memref<8x1xf32, #tpu.memory_space<vmem>>, vector<8x1xf32>
    tpu.vector_store %arg6[%c0_14, %c0_15], %14 {strides = array<i32>} : memref<8x1xf32, #tpu.memory_space<vmem>>, vector<8x1xf32>,
    %c0_16 = arith.constant 0 : index
    %c0_17 = arith.constant 0 : index
    %27 = vector.load %arg8[%c0_16, %c0_17] : memref<8x1xf32, #tpu.memory_space<vmem>>, vector<8x1xf32>
    %28 = vector.broadcast %10 : vector<8x1xi32> to vector<8x128xi32>
    %29 = arith.cmpi eq, %7, %28 : vector<8x128xi32>
    %cst_18 = arith.constant 0.000000e+00 : f32
    %30 = vector.broadcast %cst_18 : f32 to vector<8x128xf32>
    %31 = arith.select %29, %4, %30 : vector<8x128xi1>, vector<8x128xf32>
    %cst_19 = arith.constant dense<0.000000e+00> : vector<8xf32>
    %32 = vector.multi_reduction <add>, %31, %cst_19 [1] : vector<8x128xf32> to vector<8xf32>
    %33 = vector.shape_cast %32 : vector<8xf32> to vector<8x1xf32>
    %34 = arith.addf %27, %33 : vector<8x1xf32>
    %c0_20 = arith.constant 0 : index
    %c0_21 = arith.constant 0 : index
    %35 = vector.load %arg8[%c0_20, %c0_21] : memref<8x1xf32, #tpu.memory_space<vmem>>, vector<8x1xf32>
    tpu.vector_store %arg8[%c0_20, %c0_21], %34 {strides = array<i32>} : memref<8x1xf32, #tpu.memory_space<vmem>>, vector<8x1xf32>,
    %c0_i32_22 = arith.constant 0 : i32
    %36 = arith.cmpi eq, %arg2, %c0_i32_22 : i32
    %37 = arith.extui %36 : i1 to i32
    %c0_i32_23 = arith.constant 0 : i32
    %38 = arith.cmpi ne, %37, %c0_i32_23 : i32
    scf.if %38 {
      %c0_24 = arith.constant 0 : index
      %c0_25 = arith.constant 0 : index
      %39 = vector.load %arg6[%c0_24, %c0_25] : memref<8x1xf32, #tpu.memory_space<vmem>>, vector<8x1xf32>
      %c0_26 = arith.constant 0 : index
      %c0_27 = arith.constant 0 : index
      %40 = vector.load %arg7[%c0_26, %c0_27] : memref<8x1xf32, #tpu.memory_space<vmem>>, vector<8x1xf32>
      %41 = math.log %40 : vector<8x1xf32>
      %42 = arith.addf %39, %41 : vector<8x1xf32>
      %c-100_i32 = arith.constant -100 : i32
      %43 = vector.broadcast %c-100_i32 : i32 to vector<8x1xi32>
      %44 = arith.cmpi ne, %6, %43 : vector<8x1xi32>
      %c0_28 = arith.constant 0 : index
      %c0_29 = arith.constant 0 : index
      %45 = vector.load %arg8[%c0_28, %c0_29] : memref<8x1xf32, #tpu.memory_space<vmem>>, vector<8x1xf32>
      %46 = arith.subf %42, %45 : vector<8x1xf32>
      %cst_30 = arith.constant 0.000000e+00 : f32
      %47 = vector.broadcast %cst_30 : f32 to vector<8x1xf32>
      %48 = arith.select %44, %46, %47 : vector<8x1xi1>, vector<8x1xf32>
      %49 = vector.shape_cast %48 : vector<8x1xf32> to vector<1x8x1xf32>
      %cst_31 = arith.constant dense<0.000000e+00> : vector<1xf32>
      %50 = vector.multi_reduction <add>, %49, %cst_31 [1, 2] : vector<1x8x1xf32> to vector<1xf32>
      %51 = vector.shape_cast %50 : vector<1xf32> to vector<1x1x1xf32>
      %52 = vector.extract %51[0, 0, 0] : f32 from vector<1x1x1xf32>
      %cst_32 = arith.constant 0.000000e+00 : f32
      %53 = vector.broadcast %cst_32 : f32 to vector<1x1x8x128xf32>
      %54 = vector.broadcast %52 : f32 to vector<1x1x8x128xf32>
      %55 = arith.addf %53, %54 : vector<1x1x8x128xf32>
      %c0_33 = arith.constant 0 : index
      %c0_34 = arith.constant 0 : index
      %c0_35 = arith.constant 0 : index
      %c0_36 = arith.constant 0 : index
      %56 = vector.load %arg5[%c0_33, %c0_34, %c0_35, %c0_36] : memref<1x1x8x128xf32, #tpu.memory_space<vmem>>, vector<1x1x8x128xf32>
      tpu.vector_store %arg5[%c0_33, %c0_34, %c0_35, %c0_36], %55 {strides = array<i32>} : memref<1x1x8x128xf32, #tpu.memory_space<vmem>>, vector<1x1x8x128xf32>,
    } else {
    }
    return
  }
  func.func @transform_0(%arg0: i32, %arg1: i32, %arg2: i32) -> (i32, i32, i32) {
    %c0_i32 = arith.constant 0 : i32
    return %arg0, %arg1, %arg2 : i32, i32, i32
  }
  func.func @transform_1(%arg0: i32, %arg1: i32, %arg2: i32) -> (i32, i32, i32, i32) {
    %c0_i32 = arith.constant 0 : i32
    %c0_i32_0 = arith.constant 0 : i32
    %c0_i32_1 = arith.constant 0 : i32
    return %arg0, %arg1, %c0_i32, %c0_i32_0 : i32, i32, i32, i32
  }
  func.func @transform_2(%arg0: i32, %arg1: i32, %arg2: i32) -> (i32, i32, i32, i32) {
    %c0_i32 = arith.constant 0 : i32
    %c0_i32_0 = arith.constant 0 : i32
    %c0_i32_1 = arith.constant 0 : i32
    return %arg0, %arg1, %c0_i32, %c0_i32_0 : i32, i32, i32, i32
  }
}

</mosaic_0001>

<llo_original>
// kernel: gpt_lm_loss.1
$region0: #{gpt_lm_loss.1}
  #allocation0 [shape = 'u32[]', space=smem, size = 0x4, offset = 0x4, fixed_abs, tag = 'smem constant byte address 0x4 - core index']
  #allocation1 [shape = 'u32[72,128]{1,0:T(1,128)}', space=vmem, size = 0x9000, scoped, tag = 'internal scratch']
  #allocation2 [shape = 'f32[8,1]{1,0:T(8,128)}', space=vmem, size = 0x1000, scoped, tag = 'scratch operand']
  #allocation3 [shape = 'f32[8,1]{1,0:T(8,128)}', space=vmem, size = 0x1000, scoped, tag = 'scratch operand']
  #allocation4 [shape = 'f32[8,1]{1,0:T(8,128)}', space=vmem, size = 0x1000, scoped, tag = 'scratch operand']
  %s0 = inlined_call_operand.vmem [shape: f32[2,9,128], index: 0, kind: input, shape index: {}]
  %s1 = inlined_call_operand.vmem [shape: s32[2,1,8,1], index: 1, kind: input, shape index: {}]
  %s2 = inlined_call_operand.vmem [shape: f32[2,1,8,128], index: 2, kind: output, shape index: {}]
  %s3 = sld [smem:[#allocation0]]
  $region49: #{gpt_lm_loss.1} parent=0
    _
  %s5 = ssub.s32 1, %s3
  %s6 = scalar_select 0, %s5, %s3
  loop: start=0, step=1, limit=4
  $region2: #{gpt_lm_loss.1} parent=0 // loop_pre_header
    _
  $region3: #{gpt_lm_loss.1} parent=0 // loop_header
    %s8 = sphi 0, %s12
    %p9 = scmp.ge.s32.totalorder %s8, 4
    %s15 = sphi 0, %s34
    %s16 = sphi 0, %s30
    %s17 = sphi 0, %s26
    %s18 = sphi 0, %s15
    %s19 = sphi 0, %s16
    %s20 = sphi 0, %s17
    %s21 = sphi 0, %s18
    %s22 = sphi 0, %s19
    %s23 = sphi 0, %s20
    %s41 = sphi 0, %s43
    %s44 = sphi 0, %s41
    %s45 = sphi 0, %s44
    %s61 = sphi 0, %s45
    %s69 = sphi 0, %s71
    %s72 = sphi 0, %s69
    %s73 = sphi 0, %s72
    %s89 = sphi 0, %s73
    %s97 = sphi 0, %s99
    %s100 = sphi 0, %s97
    %s101 = sphi 0, %s100
    %s117 = sphi 0, %s101
  $region4: #{gpt_lm_loss.1} parent=0 // loop_header_branch
    %11 = sbr.rel (%p9) target = $region8
  $region5: #{gpt_lm_loss.1} parent=0 // loop_body
    %s13 = ssub.s32 %s8, 1
    %s14 = ssub.s32 %s8, 2
    %s24 = sadd.s32 1, %s17
    %p25 = scmp.ge.s32.totalorder %s24, 1
    %s26 = scalar_select %p25, 0, %s24
    %s27 = sadd.s32 1, %s16
    %s28 = scalar_select %p25, %s27, %s16
    %p29 = scmp.ge.s32.totalorder %s28, 1
    %s30 = scalar_select %p29, 0, %s28
    %s31 = sadd.s32 1, %s15
    %s32 = scalar_select %p29, %s31, %s15
    %p33 = scmp.ge.s32.totalorder %s32, 2
    %s34 = scalar_select %p33, 0, %s32
    %s35 = ssub.s32 %s15, %s34
    %s36 = ssub.s32 %s16, %s30
    %s37 = sor.u32 %s35, %s36
    %s38 = ssub.s32 %s17, %s26
    %s39 = sor.u32 %s37, %s38
    %p40 = scmp.eq.s32.totalorder %s39, 0
    %s42 = sadd.s32 %s41, 1
    %s43 = scalar_select %p40, %s41, %s42
    %p46 = pneg %p40
    %p47 = scmp.eq.s32.totalorder %s8, 1
    %p48 = por %p46, %p47
    %p49 = scmp.ne.s32.totalorder %s41, %s44
    %p50 = scmp.eq.s32.totalorder %s8, 0
    %p51 = por %p49, %p50
    %p52 = scmp.ne.s32.totalorder %s41, %s44
    %p53 = scmp.eq.s32.totalorder %s13, 1
    %p54 = por %p52, %p53
    %p55 = scmp.ne.s32.totalorder %s44, %s45
    %p56 = scmp.eq.s32.totalorder %s13, 0
    %p57 = por %p55, %p56
    %p58 = scmp.ne.s32.totalorder %s44, %s45
    %p59 = scmp.eq.s32.totalorder %s14, 1
    %p60 = por %p58, %p59
    %p62 = scmp.ne.s32.totalorder %s45, %s61
    %p63 = scmp.eq.s32.totalorder %s14, 0
    %p64 = por %p62, %p63
    %s65 = ssub.s32 %s15, %s34
    %s66 = ssub.s32 %s16, %s30
    %s67 = sor.u32 %s65, %s66
    %p68 = scmp.eq.s32.totalorder %s67, 0
    %s70 = sadd.s32 %s69, 1
    %s71 = scalar_select %p68, %s69, %s70
    %p74 = pneg %p68
    %p75 = scmp.eq.s32.totalorder %s8, 1
    %p76 = por %p74, %p75
    %p77 = scmp.ne.s32.totalorder %s69, %s72
    %p78 = scmp.eq.s32.totalorder %s8, 0
    %p79 = por %p77, %p78
    %p80 = scmp.ne.s32.totalorder %s69, %s72
    %p81 = scmp.eq.s32.totalorder %s13, 1
    %p82 = por %p80, %p81
    %p83 = scmp.ne.s32.totalorder %s72, %s73
    %p84 = scmp.eq.s32.totalorder %s13, 0
    %p85 = por %p83, %p84
    %p86 = scmp.ne.s32.totalorder %s72, %s73
    %p87 = scmp.eq.s32.totalorder %s14, 1
    %p88 = por %p86, %p87
    %p90 = scmp.ne.s32.totalorder %s73, %s89
    %p91 = scmp.eq.s32.totalorder %s14, 0
    %p92 = por %p90, %p91
    %s93 = ssub.s32 %s15, %s34
    %s94 = ssub.s32 %s16, %s30
    %s95 = sor.u32 %s93, %s94
    %p96 = scmp.eq.s32.totalorder %s95, 0
    %s98 = sadd.s32 %s97, 1
    %s99 = scalar_select %p96, %s97, %s98
    %p102 = pneg %p96
    %p103 = scmp.eq.s32.totalorder %s8, 1
    %p104 = por %p102, %p103
    %p105 = scmp.ne.s32.totalorder %s97, %s100
    %p106 = scmp.eq.s32.totalorder %s8, 0
    %p107 = por %p105, %p106
    %p108 = scmp.ne.s32.totalorder %s97, %s100
    %p109 = scmp.eq.s32.totalorder %s13, 1
    %p110 = por %p108, %p109
    %p111 = scmp.ne.s32.totalorder %s100, %s101
    %p112 = scmp.eq.s32.totalorder %s13, 0
    %p113 = por %p111, %p112
    %p114 = scmp.ne.s32.totalorder %s100, %s101
    %p115 = scmp.eq.s32.totalorder %s14, 1
    %p116 = por %p114, %p115
    %p118 = scmp.ne.s32.totalorder %s101, %s117
    %p119 = scmp.eq.s32.totalorder %s14, 0
    %p120 = por %p118, %p119
    %p121 = scmp.le.s32.totalorder 1, %s8
    %p122 = scmp.lt.s32.totalorder %s8, 3
    %p123 = pnand %p121, %p122
    %p124 = pneg %p123
    // Predicated region
    $region9: #{gpt_lm_loss.1} parent=5 // pred_check
      _
    $region10: #{gpt_lm_loss.1} parent=5 // pred_check_branch
      %126 = sbr.rel (%p123) target = $region12
    $region11: #{gpt_lm_loss.1} parent=5 // pred_region
      %s127 = ssub.s32 %s8, 1
    $region12: #{gpt_lm_loss.1} parent=5 // pred_fallthru
      _
    %p128 = scmp.lt.s32.totalorder %s8, 2
    // Predicated region
    $region13: #{gpt_lm_loss.1} parent=5 // pred_check
      %p129 = pneg %p128
    $region14: #{gpt_lm_loss.1} parent=5 // pred_check_branch
      %131 = sbr.rel (%p129) target = $region16
    $region15: #{gpt_lm_loss.1} parent=5 // pred_region
      // Predicated region
      $region17: #{gpt_lm_loss.1} parent=15 // pred_check
        %p132 = pneg %p51
      $region18: #{gpt_lm_loss.1} parent=15 // pred_check_branch
        %134 = sbr.rel (%p132) target = $region20
      $region19: #{gpt_lm_loss.1} parent=15 // pred_region
        %p135 = scmp.lt.s32.totalorder %s15, 1
        %s136 = scalar_select %p135, %s15, 1
        %p137 = scmp.lt.s32.totalorder %s16, 1
        %s138 = scalar_select %p137, %s16, 1
        %p139 = scmp.lt.s32.totalorder %s17, 0
        %s140 = scalar_select %p139, %s17, 0
        %s141 = sadd.s32 %s140, %s138
        %s142 = smul.addr %s136, 2
        %s143 = sadd.s32 %s141, %s142
        %s144 = smul.addr %s143, 8
        %s145 = scalar_lea.vmem %s0, %s144
      $region20: #{gpt_lm_loss.1} parent=15 // pred_fallthru
        _
      // Predicated region
      $region21: #{gpt_lm_loss.1} parent=15 // pred_check
        %p146 = pneg %p79
      $region22: #{gpt_lm_loss.1} parent=15 // pred_check_branch
        %148 = sbr.rel (%p146) target = $region24
      $region23: #{gpt_lm_loss.1} parent=15 // pred_region
        %p149 = scmp.lt.s32.totalorder %s15, 1
        %s150 = scalar_select %p149, %s15, 1
        %p151 = scmp.lt.s32.totalorder %s16, 0
        %s152 = scalar_select %p151, %s16, 0
        %s153 = sadd.s32 %s152, %s150
        %s154 = smul.addr %s153, 8
        %s155 = scalar_lea.vmem %s1, %s154
      $region24: #{gpt_lm_loss.1} parent=15 // pred_fallthru
        _
    $region16: #{gpt_lm_loss.1} parent=5 // pred_fallthru
      _
    %p156 = scmp.le.s32.totalorder 1, %s8
    %p157 = scmp.lt.s32.totalorder %s8, 3
    %p158 = pnand %p156, %p157
    %p159 = pneg %p158
    // Predicated region
    $region25: #{gpt_lm_loss.1} parent=5 // pred_check
      _
    $region26: #{gpt_lm_loss.1} parent=5 // pred_check_branch
      %161 = sbr.rel (%p158) target = $region28
    $region27: #{gpt_lm_loss.1} parent=5 // pred_region
      %s162 = ssub.s32 %s8, 1
      %p163 = scmp.lt.s32.totalorder %s18, 1
      %s164 = scalar_select %p163, %s18, 1
      %p165 = scmp.lt.s32.totalorder %s19, 1
      %s166 = scalar_select %p165, %s19, 1
      %p167 = scmp.lt.s32.totalorder %s20, 0
      %s168 = scalar_select %p167, %s20, 0
      %s169 = sadd.s32 %s168, %s166
      %s170 = smul.addr %s164, 2
      %s171 = sadd.s32 %s169, %s170
      %s172 = smul.addr %s171, 8
      %s173 = scalar_lea.vmem %s0, %s172
      %p174 = pneg %p57
      %p175 = pneg %p54
      %p176 = scmp.lt.s32.totalorder %s18, 1
      %s177 = scalar_select %p176, %s18, 1
      %p178 = scmp.lt.s32.totalorder %s19, 0
      %s179 = scalar_select %p178, %s19, 0
      %s180 = sadd.s32 %s179, %s177
      %s181 = smul.addr %s180, 8
      %s182 = scalar_lea.vmem %s1, %s181
      %p183 = pneg %p85
      %p184 = pneg %p82
      %p185 = pneg %p113
      %p186 = pneg %p110
      %p187 = scmp.lt.s32.totalorder %s18, 1
      %s188 = scalar_select %p187, %s18, 1
      %p189 = scmp.lt.s32.totalorder %s19, 0
      %s190 = scalar_select %p189, %s19, 0
      %s191 = sadd.s32 %s190, %s188
      %s192 = smul.addr %s191, 8
      %s193 = scalar_lea.vmem %s2, %s192
      %p194 = scmp.lt.s32.totalorder %s18, 1
      %s195 = scalar_select %p194, %s18, 1
      %p196 = scmp.lt.s32.totalorder %s19, 1
      %s197 = scalar_select %p196, %s19, 1
      %p198 = scmp.lt.s32.totalorder %s20, 0
      %s199 = scalar_select %p198, %s20, 0
      %s200 = sadd.s32 %s199, %s197
      %s201 = smul.addr %s195, 2
      %s202 = sadd.s32 %s200, %s201
      %s203 = smul.addr %s202, 8
      %s204 = scalar_lea.vmem %s0, %s203
      %p205 = scmp.lt.s32.totalorder %s18, 1
      %s206 = scalar_select %p205, %s18, 1
      %p207 = scmp.lt.s32.totalorder %s19, 0
      %s208 = scalar_select %p207, %s19, 0
      %s209 = sadd.s32 %s208, %s206
      %s210 = smul.addr %s209, 8
      %s211 = scalar_lea.vmem %s1, %s210
      %p212 = scmp.lt.s32.totalorder %s18, 1
      %s213 = scalar_select %p212, %s18, 1
      %p214 = scmp.lt.s32.totalorder %s19, 0
      %s215 = scalar_select %p214, %s19, 0
      %s216 = sadd.s32 %s215, %s213
      %s217 = smul.addr %s216, 8
      %s218 = scalar_lea.vmem %s2, %s217
      %p219 = scmp.eq.s32.totalorder %s20, 0
      // Predicated region
      $region29: #{gpt_lm_loss.1} parent=27 // pred_check
        %p220 = pneg %p219
      $region30: #{gpt_lm_loss.1} parent=27 // pred_check_branch
        %222 = sbr.rel (%p220) target = $region32
      $region31: #{gpt_lm_loss.1} parent=27 // pred_region
        %vm223 = vcmask 7168
        %224 = vst.msk [vmem:[#allocation2] sm:$0xff] %vm223, -inf
        %225 = vst.msk [vmem:[#allocation3] sm:$0xff] %vm223, 0.0
        %226 = vst.msk [vmem:[#allocation4] sm:$0xff] %vm223, 0.0
      $region32: #{gpt_lm_loss.1} parent=27 // pred_fallthru
        _
      %v227 = vld [vmem:[%s204] sm:$0xff]
      %v228 = vld [vmem:[%s211] sm:$0xff]
      %v229 = vlaneseq
      %v230 = vand.u32 %v229, 127
      %s231 = smul.u32 %s20, 128
      %v232 = vstv %s231
      %v233 = vsub.s32 %v228, %v232
      %v234 = vld [vmem:[#allocation2] sm:$0xff]
      %235 = vmax.xlane.f32.xlu0 %v227
      %v236 = vpop.xlane.xlu0 %235
      %v237 = vmax.f32 %v234, %v236
      %v238 = vsub.f32 %v234, %v237
      %v239 = vmul.f32 %v238, 1.442695
      %v240 = vpow.pop %v239
      %242 = vset.pattern.permute.xlu0 0
      %243 = vperm.xlu0 %242, %v237
      %v244 = vpop.permute.xlu0 %243
      %v246 = vsub.f32 %v227, %v244
      %v247 = vmul.f32 %v246, 1.442695
      %v248 = vpow.pop %v247
      %v249 = vld [vmem:[#allocation3] sm:$0xff]
      %v250 = vmul.f32 %v249, %v240
      %251 = vadd.xlane.f32.xlu0 %v248
      %v252 = vpop.xlane.xlu0 %251
      %v253 = vadd.f32 %v250, %v252
      %vm254 = vcmask 7168
      %255 = vst.msk [vmem:[#allocation3] sm:$0xff] %vm254, %v253
      %256 = vst.msk [vmem:[#allocation2] sm:$0xff] %vm254, %v237
      %v257 = vld [vmem:[#allocation4] sm:$0xff]
      %258 = vset.pattern.permute.xlu0 0
      %259 = vperm.xlu0 %258, %v233
      %v260 = vpop.permute.xlu0 %259
      %vm261 = vcmp.eq.s32.totalorder %v230, %v260
      %v262 = vsel %vm261, %v227, 0.0
      %263 = vadd.xlane.f32.xlu0 %v262
      %v264 = vpop.xlane.xlu0 %263
      %v265 = vadd.f32 %v257, %v264
      %266 = vst.msk [vmem:[#allocation4] sm:$0xff] %vm254, %v265
      // Predicated region
      $region33: #{gpt_lm_loss.1} parent=27 // pred_check
        %p267 = pneg %p219
      $region34: #{gpt_lm_loss.1} parent=27 // pred_check_branch
        %269 = sbr.rel (%p267) target = $region36
      $region35: #{gpt_lm_loss.1} parent=27 // pred_region
        %v270 = vld [vmem:[#allocation2] sm:$0xff]
        %v271 = vld [vmem:[#allocation3] sm:$0xff]
        %v272 = vlog2.pop %v271
        %v273 = vmul.f32 %v272, 0.6931472
        %v274 = vadd.f32 %v270, %v273
        %vm275 = vcmp.ne.s32.totalorder %v228, 4294967196
        %v276 = vld [vmem:[#allocation4] sm:$0xff]
        %v277 = vsub.f32 %v274, %v276
        %v278 = vsel %vm275, %v277, 0.0
        %v279 = vsel %vm254, %v278, 0.0
        %280 = vadd.xlane.f32.xlu0 %v279
        %v281 = vpop.xlane.xlu0 %280
        %v282 = vrot.slane %v281, 4
        %v283 = vadd.f32 %v281, %v282
        %v284 = vrot.slane %v283, 2
        %v285 = vadd.f32 %v283, %v284
        %v286 = vrot.slane %v285, 1
        %v287 = vadd.f32 %v285, %v286
        %s288 = vtos %v287
        %v289 = vstv %s288
        %v290 = vadd.f32 %v289, 0.0
        %291 = vst [vmem:[%s218] sm:$0xff] %v290
      $region36: #{gpt_lm_loss.1} parent=27 // pred_fallthru
        _
      %p292 = scmp.lt.s32.totalorder %s18, 1
      %s293 = scalar_select %p292, %s18, 1
      %p294 = scmp.lt.s32.totalorder %s19, 0
      %s295 = scalar_select %p294, %s19, 0
      %s296 = sadd.s32 %s295, %s293
      %s297 = smul.addr %s296, 8
      %s298 = scalar_lea.vmem %s2, %s297
      // Predicated region
      $region37: #{gpt_lm_loss.1} parent=27 // pred_check
        %p299 = pneg %p110
      $region38: #{gpt_lm_loss.1} parent=27 // pred_check_branch
        %301 = sbr.rel (%p299) target = $region40
      $region39: #{gpt_lm_loss.1} parent=27 // pred_region
        _
      $region40: #{gpt_lm_loss.1} parent=27 // pred_fallthru
        _
    $region28: #{gpt_lm_loss.1} parent=5 // pred_fallthru
      _
    %p302 = scmp.le.s32.totalorder 2, %s8
    // Predicated region
    $region41: #{gpt_lm_loss.1} parent=5 // pred_check
      %p303 = pneg %p302
    $region42: #{gpt_lm_loss.1} parent=5 // pred_check_branch
      %305 = sbr.rel (%p303) target = $region44
    $region43: #{gpt_lm_loss.1} parent=5 // pred_region
      %s306 = ssub.s32 %s8, 2
      // Predicated region
      $region45: #{gpt_lm_loss.1} parent=43 // pred_check
        %p307 = pneg %p116
      $region46: #{gpt_lm_loss.1} parent=43 // pred_check_branch
        %309 = sbr.rel (%p307) target = $region48
      $region47: #{gpt_lm_loss.1} parent=43 // pred_region
        %p310 = scmp.lt.s32.totalorder %s21, 1
        %s311 = scalar_select %p310, %s21, 1
        %p312 = scmp.lt.s32.totalorder %s22, 0
        %s313 = scalar_select %p312, %s22, 0
        %s314 = sadd.s32 %s313, %s311
        %s315 = smul.addr %s314, 8
        %s316 = scalar_lea.vmem %s2, %s315
      $region48: #{gpt_lm_loss.1} parent=43 // pred_fallthru
        _
    $region44: #{gpt_lm_loss.1} parent=5 // pred_fallthru
      _
  $region6: #{gpt_lm_loss.1} parent=0 // loop_footer
    %s12 = sadd.s32 1, %s8
  $region7: #{gpt_lm_loss.1} parent=0 // loop_footer_branch
    %7 = sbr.rel target = $region3
  $region8: #{gpt_lm_loss.1} parent=0 // loop_exit
    _

</llo_original>
